<compile_context>
chip_gen: v7x
topology: tpu7x:2x2x1
jax: 0.10.0
libtpu: 0.0.40
codegen_flags: <defaults>
</compile_context>

<pallas_src>
import functools

import jax
import jax.numpy as jnp
from jax import lax
from jax.experimental import pallas as pl
from jax.experimental.pallas import tpu as pltpu

BN_EPS = 1e-5


def precompute_mesh_operators(lap, dew, dns, nv_prev):
    """Build the bf16 operator RHS ONCE per mesh level; cache it outside the train step.

    Returns ops[3, nv_prev, nv_pad] = stacked [lap^T | grad_EW^T | grad_NS^T] where
      * only the first nv_prev input-vertex columns are kept (the stride-2 transpose-conv
        zero pad means all other input vertices are zero -> zero-pad elision),
      * each operator is pre-transposed so the contracting dim is the sublane axis,
      * the output-vertex dim is zero-padded from nv to a multiple of 128 (lane-dense).
    """
    nv = lap.shape[0]
    nv_pad = pl.cdiv(nv, 128) * 128

    def blk(m):  # [nv, nv] -> [nv_prev, nv_pad]
        return jnp.pad(m[:, :nv_prev].T, ((0, 0), (0, nv_pad - nv)))

    ops = jnp.stack([blk(lap), blk(dew), blk(dns)], axis=0)      # [3, nv_prev, nv_pad]
    # TODO(synk): on v7x store this RHS in fp8 (e4m3) with per-row scales folded into the
    # conv weights; on v5e consider int8 -- halves the bytes of the bandwidth-bound matmul.
    # TODO(synk): for mesh_lvl >= 3 replace these densified [V, V] operators with the real
    # sparse (~7 nnz/row) mesh operators in gather / segment-sum form (scalar-prefetched
    # neighbor tables), and tile the output-vertex dim with a generation-specific VMEM
    # budget plus a leading "parallel" grid axis (partial BN sums) for v7x's two cores.
    return ops.astype(jnp.bfloat16)


def _cross_upsamp_kernel(x_ref, wall_ref, ops_ref, gamma_ref, beta_ref, o_ref,
                         *, B, O, nv, nv_prev, nv_pad):
    # x_ref:     [B*C, nv_pad]        f32   coarse signal, lane-padded with exact zeros
    # wall_ref:  [4*B*O, B*C]         f32   block-diag 1x1-conv weights, rows (g, b, o),
    #                                       groups ordered [id | lap | ew | ns]
    # ops_ref:   [3, nv_prev, nv_pad] bf16  precomputed operator RHS (no identity block)
    # gamma/beta:[O, 1]               f32   BatchNorm affine params
    # o_ref:     [B, O, nv_pad]             output
    BO = B * O

    # ---- 1. channel mix FIRST (commutes with the vertex-domain operators): one small
    #         non-batched f32 matmul produces all four per-group mixed signals at once.
    z = jnp.dot(wall_ref[...], x_ref[...],
                preferred_element_type=jnp.float32)              # [4*B*O, nv_pad]

    # ---- 2. identity feature: the stride-2 zero pad puts the coarse verts at the first
    #         lanes, so the mixed identity group IS the first contribution to y (lanes
    #         >= nv_prev are exact zeros).  Stays f32, never routed through the MXU RHS.
    y = z[0:BO, :]                                               # [B*O, nv_pad]

    # ---- 3. vertex-domain operators: three 2-D MXU matmuls (bf16 in, f32 accumulate),
    #         each contracting only the nv_prev live input vertices (zero-pad elision).
    for g in range(3):
        zg = z[(g + 1) * BO:(g + 2) * BO, 0:nv_prev].astype(jnp.bfloat16)
        y = y + jnp.dot(zg, ops_ref[g], preferred_element_type=jnp.float32)
    # NOTE: the MeshConvTranspose bias is intentionally omitted -- a per-channel constant
    # added before training-mode BatchNorm is cancelled exactly by the mean subtraction.

    y = y.reshape(B, O, nv_pad)                                  # leading-dim split only

    # ---- 4. BatchNorm1d (training-mode stats, biased var), two-pass mean-subtracted
    #         variance for robustness.  Padded lanes (u >= nv) are exact zeros pre-affine,
    #         so they contribute 0 to the mean sum; mask them out of the variance.
    #         (Single-pass sum / sum-of-squares is cheaper once the output is N-tiled for
    #          large meshes; at this size y is vreg/VMEM-resident so two-pass is free.)
    n = float(B * nv)
    mean = jnp.sum(jnp.sum(y, axis=2, keepdims=True), axis=0, keepdims=True) / n  # [1,O,1]
    lane = lax.broadcasted_iota(jnp.int32, (1, 1, nv_pad), 2)
    mask = (lane < nv).astype(jnp.float32)                       # real-vertex lane mask
    d = (y - mean) * mask
    var = jnp.sum(jnp.sum(d * d, axis=2, keepdims=True), axis=0, keepdims=True) / n
    scale = gamma_ref[...][None, :, :] * lax.rsqrt(var + BN_EPS)
    shift = beta_ref[...][None, :, :] - mean * scale

    # ---- 5. folded affine + ReLU; zero the padded lanes so the lane-padded layout can be
    #         handed directly to a downstream consumer.
    o_ref[...] = (jnp.maximum(y * scale + shift, 0.0) * mask).astype(o_ref.dtype)


def cross_upsamp(x, ops_bf16, w, bias, gamma, beta, *, nv,
                 out_dtype=jnp.float32, keep_padded=False):
    """CrossUpSamp forward.

    x        [B, C_in, nv_prev]  coarse-mesh signal
    ops_bf16 [3, nv_prev, nv_pad] precomputed by precompute_mesh_operators (reuse it!)
    w        [C_out, 4*C_in]     1x1-conv coeffs, groups [id | lap | ew | ns]
    bias     accepted for API parity with MeshConvTranspose; mathematical no-op here
             (cancelled exactly by training-mode BatchNorm mean subtraction).
    Returns  [B, C_out, nv] (or [B, C_out, nv_pad] lane-padded if keep_padded=True).
    """
    del bias
    B, C, nv_prev = x.shape
    assert ops_bf16.shape[1] == nv_prev
    nv_pad = ops_bf16.shape[2]
    O = w.shape[0]

    # Tiny per-call prep (layout plumbing only; the O(nv^2) operator prep is precomputed).
    x2d = jnp.pad(x.reshape(B * C, nv_prev).astype(jnp.float32),
                  ((0, 0), (0, nv_pad - nv_prev)))               # [B*C, nv_pad]
    w4 = w.reshape(O, 4, C).astype(jnp.float32)
    eyeb = jnp.eye(B, dtype=jnp.float32)
    # Block-diagonal weight: w_all[(g,b,o), (b',c)] = delta(b,b') * w4[o,g,c]
    w_all = jnp.einsum('bp,ogc->gbopc', eyeb, w4).reshape(4 * B * O, B * C)
    gamma = jnp.asarray(gamma, jnp.float32).reshape(O, 1)
    beta = jnp.asarray(beta, jnp.float32).reshape(O, 1)

    kernel = functools.partial(_cross_upsamp_kernel,
                               B=B, O=O, nv=nv, nv_prev=nv_prev, nv_pad=nv_pad)

    def full_spec(a):
        nd = a.ndim
        return pl.BlockSpec(a.shape, lambda i, _nd=nd: (0,) * _nd)

    args = (x2d, w_all, ops_bf16, gamma, beta)
    out = pl.pallas_call(
        kernel,
        out_shape=jax.ShapeDtypeStruct((B, O, nv_pad), out_dtype),
        grid=(1,),   # toy sizes: the whole (bf16, identity-free) problem fits in VMEM
        in_specs=[full_spec(a) for a in args],
        out_specs=pl.BlockSpec((B, O, nv_pad), lambda i: (0, 0, 0)),
        compiler_params=pltpu.CompilerParams(
            dimension_semantics=("arbitrary",)),
    )(*args)
    if keep_padded:
        return out           # padded lanes are exact zeros (masked in-kernel)
    return out[:, :, :nv]


if __name__ == "__main__":
    # Module config: CrossUpSamp(in_channels=4, out_channels=8, mesh_lvl=2)
    B, C_in, C_out, mesh_lvl = 2, 4, 8, 2
    nv = 10 * 4 ** mesh_lvl + 2              # 162 vertices on the fine (level-2) ico mesh
    nv_prev = 10 * 4 ** (mesh_lvl - 1) + 2   # 42 vertices on the coarse (level-1) mesh

    key = jax.random.PRNGKey(0)
    kx, kl, ke, kn, kw, kb = jax.random.split(key, 6)

    # Input: coarse-mesh feature map [B, C_in, nv_prev]
    x = jax.random.normal(kx, (B, C_in, nv_prev), dtype=jnp.float32)

    # TODO(synk): the real MeshConvTranspose loads sparse icosahedral-mesh operators
    # (L, G, F2V, NS, EW) from a precomputed pickle; deterministic dense stand-ins for the
    # composed vertex->vertex operators are synthesized here instead.
    lap = jax.random.normal(kl, (nv, nv), dtype=jnp.float32) / nv
    dew = jax.random.normal(ke, (nv, nv), dtype=jnp.float32) / nv
    dns = jax.random.normal(kn, (nv, nv), dtype=jnp.float32) / nv

    # MeshConv coeffs [out_c, 4*in_c] (groups [id|lap|ew|ns]); conv bias; BN defaults.
    coeffs = jax.random.normal(kw, (C_out, 4 * C_in), dtype=jnp.float32) * 0.1
    bias = jax.random.normal(kb, (C_out, 1), dtype=jnp.float32) * 0.1
    gamma = jnp.ones((C_out, 1), dtype=jnp.float32)
    beta = jnp.zeros((C_out, 1), dtype=jnp.float32)

    # Precompute the operator RHS ONCE per mesh level (not per forward call).
    ops = jax.block_until_ready(precompute_mesh_operators(lap, dew, dns, nv_prev))

    out = cross_upsamp(x, ops, coeffs, bias, gamma, beta, nv=nv)
    out = jax.block_until_ready(out)

    # Pure-JAX f32 reference of the original module (zero-pad -> 4 mesh features ->
    # 1x1 conv + bias -> training-mode BN -> ReLU).  The kernel drops the bias (BN
    # cancels it) and uses bf16 for the operator matmuls, so compare loosely.
    x_pad = jnp.pad(x, ((0, 0), (0, 0), (0, nv - nv_prev)))
    f_lap = jnp.einsum('bcv,uv->bcu', x_pad, lap)
    f_ew = jnp.einsum('bcv,uv->bcu', x_pad, dew)
    f_ns = jnp.einsum('bcv,uv->bcu', x_pad, dns)
    feat = jnp.concatenate([x_pad, f_lap, f_ew, f_ns], axis=1)
    y = jnp.einsum('ok,bkv->bov', coeffs, feat) + bias[None]
    mean = y.mean(axis=(0, 2), keepdims=True)
    var = ((y - mean) ** 2).mean(axis=(0, 2), keepdims=True)
    ref = jnp.maximum((y - mean) / jnp.sqrt(var + BN_EPS) * gamma[None] + beta[None], 0.0)

    assert out.shape == (B, C_out, nv)
    assert bool(jnp.all(out >= 0.0))                      # ReLU post-condition
    err = float(jnp.max(jnp.abs(out - ref)))
    assert err < 0.15, f"max abs err vs f32 reference: {err}"
    print("KERNEL_OK")
</pallas_src>

<mosaic_0001>
module attributes {stable_mosaic.version = 11 : i64} {
  func.func @_cross_upsamp_kernel(%arg0: i32, %arg1: memref<8x256xf32, #tpu.memory_space<vmem>>, %arg2: memref<64x8xf32, #tpu.memory_space<vmem>>, %arg3: memref<3x42x256xbf16, #tpu.memory_space<vmem>>, %arg4: memref<8x1xf32, #tpu.memory_space<vmem>>, %arg5: memref<8x1xf32, #tpu.memory_space<vmem>>, %arg6: memref<2x8x256xf32, #tpu.memory_space<vmem>>) attributes {dimension_semantics = [#tpu.dimension_semantics<arbitrary>], iteration_bounds = array<i64: 1>, scalar_prefetch = 0 : i64, scratch_operands = 0 : i64, tpu.core_type = #tpu.core_type<tc>, window_params = [{pipeline_mode = #tpu.pipeline_mode<synchronous>, transform_indices = @transform_0, window_bounds = array<i64: 8, 256>}, {pipeline_mode = #tpu.pipeline_mode<synchronous>, transform_indices = @transform_1, window_bounds = array<i64: 64, 8>}, {pipeline_mode = #tpu.pipeline_mode<synchronous>, transform_indices = @transform_2, window_bounds = array<i64: 3, 42, 256>}, {pipeline_mode = #tpu.pipeline_mode<synchronous>, transform_indices = @transform_3, window_bounds = array<i64: 8, 1>}, {pipeline_mode = #tpu.pipeline_mode<synchronous>, transform_indices = @transform_4, window_bounds = array<i64: 8, 1>}, {pipeline_mode = #tpu.pipeline_mode<synchronous>, transform_indices = @transform_5, window_bounds = array<i64: 2, 8, 256>}]} {
    %c0 = arith.constant 0 : index
    %c0_0 = arith.constant 0 : index
    %0 = vector.load %arg2[%c0, %c0_0] : memref<64x8xf32, #tpu.memory_space<vmem>>, vector<64x8xf32>
    %c0_1 = arith.constant 0 : index
    %c0_2 = arith.constant 0 : index
    %1 = vector.load %arg1[%c0_1, %c0_2] : memref<8x256xf32, #tpu.memory_space<vmem>>, vector<8x256xf32>
    %cst = arith.constant dense<0.000000e+00> : vector<64x256xf32>
    %2 = tpu.matmul %0, %1, %cst {dimension_numbers = #tpu.dot_dimension_numbers<[1], [0], [0], [1], [0, 0, 1, 1], [], []>} : vector<64x8xf32>, vector<8x256xf32>, vector<64x256xf32> -> vector<64x256xf32>
    %3 = vector.extract_strided_slice %2 {offsets = [0, 0], sizes = [16, 256], strides = [1, 1]} : vector<64x256xf32> to vector<16x256xf32>
    %4 = vector.extract_strided_slice %2 {offsets = [16, 0], sizes = [16, 42], strides = [1, 1]} : vector<64x256xf32> to vector<16x42xf32>
    %5 = arith.truncf %4 : vector<16x42xf32> to vector<16x42xbf16>
    %c0_3 = arith.constant 0 : index
    %c0_4 = arith.constant 0 : index
    %c0_5 = arith.constant 0 : index
    %6 = vector.load %arg3[%c0_3, %c0_4, %c0_5] : memref<3x42x256xbf16, #tpu.memory_space<vmem>>, vector<1x42x256xbf16>
    %7 = vector.shape_cast %6 : vector<1x42x256xbf16> to vector<42x256xbf16>
    %cst_6 = arith.constant dense<0.000000e+00> : vector<16x256xf32>
    %8 = tpu.matmul %5, %7, %cst_6 {dimension_numbers = #tpu.dot_dimension_numbers<[1], [0], [0], [1], [0, 0, 1, 1], [], []>} : vector<16x42xbf16>, vector<42x256xbf16>, vector<16x256xf32> -> vector<16x256xf32>
    %9 = arith.addf %3, %8 : vector<16x256xf32>
    %10 = vector.extract_strided_slice %2 {offsets = [32, 0], sizes = [16, 42], strides = [1, 1]} : vector<64x256xf32> to vector<16x42xf32>
    %11 = arith.truncf %10 : vector<16x42xf32> to vector<16x42xbf16>
    %c1 = arith.constant 1 : index
    %c0_7 = arith.constant 0 : index
    %c0_8 = arith.constant 0 : index
    %12 = vector.load %arg3[%c1, %c0_7, %c0_8] : memref<3x42x256xbf16, #tpu.memory_space<vmem>>, vector<1x42x256xbf16>
    %13 = vector.shape_cast %12 : vector<1x42x256xbf16> to vector<42x256xbf16>
    %cst_9 = arith.constant dense<0.000000e+00> : vector<16x256xf32>
    %14 = tpu.matmul %11, %13, %cst_9 {dimension_numbers = #tpu.dot_dimension_numbers<[1], [0], [0], [1], [0, 0, 1, 1], [], []>} : vector<16x42xbf16>, vector<42x256xbf16>, vector<16x256xf32> -> vector<16x256xf32>
    %15 = arith.addf %9, %14 : vector<16x256xf32>
    %16 = vector.extract_strided_slice %2 {offsets = [48, 0], sizes = [16, 42], strides = [1, 1]} : vector<64x256xf32> to vector<16x42xf32>
    %17 = arith.truncf %16 : vector<16x42xf32> to vector<16x42xbf16>
    %c2 = arith.constant 2 : index
    %c0_10 = arith.constant 0 : index
    %c0_11 = arith.constant 0 : index
    %18 = vector.load %arg3[%c2, %c0_10, %c0_11] : memref<3x42x256xbf16, #tpu.memory_space<vmem>>, vector<1x42x256xbf16>
    %19 = vector.shape_cast %18 : vector<1x42x256xbf16> to vector<42x256xbf16>
    %cst_12 = arith.constant dense<0.000000e+00> : vector<16x256xf32>
    %20 = tpu.matmul %17, %19, %cst_12 {dimension_numbers = #tpu.dot_dimension_numbers<[1], [0], [0], [1], [0, 0, 1, 1], [], []>} : vector<16x42xbf16>, vector<42x256xbf16>, vector<16x256xf32> -> vector<16x256xf32>
    %21 = arith.addf %15, %20 : vector<16x256xf32>
    %22 = vector.shape_cast %21 : vector<16x256xf32> to vector<2x8x256xf32>
    %cst_13 = arith.constant dense<0.000000e+00> : vector<2x8xf32>
    %23 = vector.multi_reduction <add>, %22, %cst_13 [2] : vector<2x8x256xf32> to vector<2x8xf32>
    %24 = vector.shape_cast %23 : vector<2x8xf32> to vector<2x8x1xf32>
    %cst_14 = arith.constant dense<0.000000e+00> : vector<8x1xf32>
    %25 = vector.multi_reduction <add>, %24, %cst_14 [0] : vector<2x8x1xf32> to vector<8x1xf32>
    %26 = vector.shape_cast %25 : vector<8x1xf32> to vector<1x8x1xf32>
    %cst_15 = arith.constant 3.240000e+02 : f32
    %27 = vector.broadcast %cst_15 : f32 to vector<1x8x1xf32>
    %28 = arith.divf %26, %27 : vector<1x8x1xf32>
    %29 = tpu.iota {dimensions = array<i32: 2>} : vector<1x1x256xi32>
    %c162_i32 = arith.constant 162 : i32
    %30 = vector.broadcast %c162_i32 : i32 to vector<1x1x256xi32>
    %31 = arith.cmpi slt, %29, %30 : vector<1x1x256xi32>
    %32 = arith.extui %31 : vector<1x1x256xi1> to vector<1x1x256xi32>
    %33 = arith.sitofp %32 : vector<1x1x256xi32> to vector<1x1x256xf32>
    %34 = vector.broadcast %28 : vector<1x8x1xf32> to vector<2x8x256xf32>
    %35 = arith.subf %22, %34 : vector<2x8x256xf32>
    %36 = vector.broadcast %33 : vector<1x1x256xf32> to vector<2x8x256xf32>
    %37 = arith.mulf %35, %36 : vector<2x8x256xf32>
    %38 = arith.mulf %37, %37 : vector<2x8x256xf32>
    %cst_16 = arith.constant dense<0.000000e+00> : vector<2x8xf32>
    %39 = vector.multi_reduction <add>, %38, %cst_16 [2] : vector<2x8x256xf32> to vector<2x8xf32>
    %40 = vector.shape_cast %39 : vector<2x8xf32> to vector<2x8x1xf32>
    %cst_17 = arith.constant dense<0.000000e+00> : vector<8x1xf32>
    %41 = vector.multi_reduction <add>, %40, %cst_17 [0] : vector<2x8x1xf32> to vector<8x1xf32>
    %42 = vector.shape_cast %41 : vector<8x1xf32> to vector<1x8x1xf32>
    %cst_18 = arith.constant 3.240000e+02 : f32
    %43 = vector.broadcast %cst_18 : f32 to vector<1x8x1xf32>
    %44 = arith.divf %42, %43 : vector<1x8x1xf32>
    %c0_19 = arith.constant 0 : index
    %c0_20 = arith.constant 0 : index
    %45 = vector.load %arg4[%c0_19, %c0_20] : memref<8x1xf32, #tpu.memory_space<vmem>>, vector<8x1xf32>
    %46 = vector.shape_cast %45 : vector<8x1xf32> to vector<1x8x1xf32>
    %cst_21 = arith.constant 9.99999974E-6 : f32
    %47 = vector.broadcast %cst_21 : f32 to vector<1x8x1xf32>
    %48 = arith.addf %44, %47 : vector<1x8x1xf32>
    %49 = math.rsqrt %48 : vector<1x8x1xf32>
    %50 = arith.mulf %46, %49 : vector<1x8x1xf32>
    %c0_22 = arith.constant 0 : index
    %c0_23 = arith.constant 0 : index
    %51 = vector.load %arg5[%c0_22, %c0_23] : memref<8x1xf32, #tpu.memory_space<vmem>>, vector<8x1xf32>
    %52 = vector.shape_cast %51 : vector<8x1xf32> to vector<1x8x1xf32>
    %53 = arith.mulf %28, %50 : vector<1x8x1xf32>
    %54 = arith.subf %52, %53 : vector<1x8x1xf32>
    %55 = vector.broadcast %50 : vector<1x8x1xf32> to vector<2x8x256xf32>
    %56 = arith.mulf %22, %55 : vector<2x8x256xf32>
    %57 = vector.broadcast %54 : vector<1x8x1xf32> to vector<2x8x256xf32>
    %58 = arith.addf %56, %57 : vector<2x8x256xf32>
    %cst_24 = arith.constant 0.000000e+00 : f32
    %59 = vector.broadcast %cst_24 : f32 to vector<2x8x256xf32>
    %60 = arith.maximumf %58, %59 : vector<2x8x256xf32>
    %61 = vector.broadcast %33 : vector<1x1x256xf32> to vector<2x8x256xf32>
    %62 = arith.mulf %60, %61 : vector<2x8x256xf32>
    %c0_25 = arith.constant 0 : index
    %c0_26 = arith.constant 0 : index
    %c0_27 = arith.constant 0 : index
    %63 = vector.load %arg6[%c0_25, %c0_26, %c0_27] : memref<2x8x256xf32, #tpu.memory_space<vmem>>, vector<2x8x256xf32>
    tpu.vector_store %arg6[%c0_25, %c0_26, %c0_27], %62 {strides = array<i32>} : memref<2x8x256xf32, #tpu.memory_space<vmem>>, vector<2x8x256xf32>,
    return
  }
  func.func @transform_0(%arg0: i32) -> (i32, i32) {
    %c0_i32 = arith.constant 0 : i32
    %c0_i32_0 = arith.constant 0 : i32
    %c0_i32_1 = arith.constant 0 : i32
    return %c0_i32, %c0_i32_0 : i32, i32
  }
  func.func @transform_1(%arg0: i32) -> (i32, i32) {
    %c0_i32 = arith.constant 0 : i32
    %c0_i32_0 = arith.constant 0 : i32
    %c0_i32_1 = arith.constant 0 : i32
    return %c0_i32, %c0_i32_0 : i32, i32
  }
  func.func @transform_2(%arg0: i32) -> (i32, i32, i32) {
    %c0_i32 = arith.constant 0 : i32
    %c0_i32_0 = arith.constant 0 : i32
    %c0_i32_1 = arith.constant 0 : i32
    %c0_i32_2 = arith.constant 0 : i32
    return %c0_i32, %c0_i32_0, %c0_i32_1 : i32, i32, i32
  }
  func.func @transform_3(%arg0: i32) -> (i32, i32) {
    %c0_i32 = arith.constant 0 : i32
    %c0_i32_0 = arith.constant 0 : i32
    %c0_i32_1 = arith.constant 0 : i32
    return %c0_i32, %c0_i32_0 : i32, i32
  }
  func.func @transform_4(%arg0: i32) -> (i32, i32) {
    %c0_i32 = arith.constant 0 : i32
    %c0_i32_0 = arith.constant 0 : i32
    %c0_i32_1 = arith.constant 0 : i32
    return %c0_i32, %c0_i32_0 : i32, i32
  }
  func.func @transform_5(%arg0: i32) -> (i32, i32, i32) {
    %c0_i32 = arith.constant 0 : i32
    %c0_i32_0 = arith.constant 0 : i32
    %c0_i32_1 = arith.constant 0 : i32
    %c0_i32_2 = arith.constant 0 : i32
    return %c0_i32, %c0_i32_0, %c0_i32_1 : i32, i32, i32
  }
}

</mosaic_0001>

<llo_original>
// kernel: tpu_custom_call.1
$region0: #{tpu_custom_call.1}
  #allocation0 [shape = 'u32[]', space=smem, size = 0x4, offset = 0x4, fixed_abs, tag = 'smem constant byte address 0x4 - core index']
  #allocation1 [shape = 'u32[144,128]{1,0:T(1,128)}', space=vmem, size = 0x12000, scoped, tag = 'internal scratch']
  %s0 = inlined_call_operand.vmem [shape: f32[8,256], index: 0, kind: input, shape index: {}]
  %s1 = inlined_call_operand.vmem [shape: f32[64,8], index: 1, kind: input, shape index: {}]
  %s2 = inlined_call_operand.hbm [shape: bf16[3,42,256], index: 2, kind: input, shape index: {}]
  %s3 = inlined_call_operand.vmem [shape: f32[8,1], index: 3, kind: input, shape index: {}]
  %s4 = inlined_call_operand.vmem [shape: f32[8,1], index: 4, kind: input, shape index: {}]
  %s5 = inlined_call_operand.hbm [shape: f32[2,8,256], index: 5, kind: output, shape index: {}]
  %s6 = sld [smem:[#allocation0]]
  $region34: #{tpu_custom_call.1} parent=0
    _
  %s8 = ssub.s32 1, %s6
  %s9 = scalar_select 0, %s8, %s6
  $region1: #{tpu_custom_call.1} parent=0
    #allocation2 [shape = 'u8[73728]{0}', space=vmem, size = 0x12000, scoped, tag = 'input window, operand 2, single buffered']
    #allocation3 [shape = 's32[1]{0}', space=sflag, size = 0x4, scoped, tag = 'scoped memory for tpu_custom_call.1']
    #allocation4 [shape = 's32[1]{0}', space=sflag, size = 0x4, scoped, tag = 'scoped memory for tpu_custom_call.1']
    #allocation5 [shape = 'u8[16384]{0}', space=vmem, size = 0x4000, scoped, tag = 'output window, operand 0, single buffered']
    %10 = vsyncpa [#allocation3], 0
    %11 = vsyncpa [#allocation4], 0
    // Predicated region
    $region2: #{tpu_custom_call.1} parent=1 // pred_check
      _
    $region3: #{tpu_custom_call.1} parent=1 // pred_check_branch
      %13 = sbr.rel (0) target = $region5
    $region4: #{tpu_custom_call.1} parent=1 // pred_region
      _
    $region5: #{tpu_custom_call.1} parent=1 // pred_fallthru
      _
    // Predicated region
    $region6: #{tpu_custom_call.1} parent=1 // pred_check
      _
    $region7: #{tpu_custom_call.1} parent=1 // pred_check_branch
      %15 = sbr.rel (0) target = $region9
    $region8: #{tpu_custom_call.1} parent=1 // pred_region
      _
    $region9: #{tpu_custom_call.1} parent=1 // pred_fallthru
      _
    // Predicated region
    $region10: #{tpu_custom_call.1} parent=1 // pred_check
      _
    $region11: #{tpu_custom_call.1} parent=1 // pred_check_branch
      %17 = sbr.rel (0) target = $region13
    $region12: #{tpu_custom_call.1} parent=1 // pred_region
      %s19 = ssub.s32 2304, 2304
      %20 = vsyncadd [#allocation3], %s19
      %s21 = sshll.u32 [#allocation2], 4
      %s22 = int_to_ptr.vmem [resolvable:$true] %s21
      %27 = dma.hbm_to_vmem [thread:$0]  %s2, 2304, %s22, [#allocation3], 128, 128, 8
    $region13: #{tpu_custom_call.1} parent=1 // pred_fallthru
      _
    // Predicated region
    $region14: #{tpu_custom_call.1} parent=1 // pred_check
      _
    $region15: #{tpu_custom_call.1} parent=1 // pred_check_branch
      %29 = sbr.rel (0) target = $region17
    $region16: #{tpu_custom_call.1} parent=1 // pred_region
      _
    $region17: #{tpu_custom_call.1} parent=1 // pred_fallthru
      _
    // Predicated region
    $region18: #{tpu_custom_call.1} parent=1 // pred_check
      _
    $region19: #{tpu_custom_call.1} parent=1 // pred_check_branch
      %31 = sbr.rel (0) target = $region21
    $region20: #{tpu_custom_call.1} parent=1 // pred_region
      _
    $region21: #{tpu_custom_call.1} parent=1 // pred_fallthru
      _
    // Predicated region
    $region22: #{tpu_custom_call.1} parent=1 // pred_check
      _
    $region23: #{tpu_custom_call.1} parent=1 // pred_check_branch
      %33 = sbr.rel (0) target = $region25
    $region24: #{tpu_custom_call.1} parent=1 // pred_region
      %34 = dma.done [#allocation3], 2304
    $region25: #{tpu_custom_call.1} parent=1 // pred_fallthru
      _
    %v36 = vld [vmem:[%s1] sm:$0xff]
    %v37 = vld [vmem:[%s1 + $0x8] sm:$0xff]
    %v38 = vld [vmem:[%s1 + $0x10] sm:$0xff]
    %v39 = vld [vmem:[%s1 + $0x18] sm:$0xff]
    %v40 = vld [vmem:[%s1 + $0x20] sm:$0xff]
    %v41 = vld [vmem:[%s1 + $0x28] sm:$0xff]
    %v42 = vld [vmem:[%s1 + $0x30] sm:$0xff]
    %v43 = vld [vmem:[%s1 + $0x38] sm:$0xff]
    %v44 = vld [vmem:[%s0] sm:$0xff]
    %v45 = vld [vmem:[%s0 + $0x8] sm:$0xff]
    %vm46 = vcmask 64512
    %v48 = vsel %vm46, %v36, 0
    %v51 = vsel %vm46, %v37, 0
    %v54 = vsel %vm46, %v38, 0
    %v57 = vsel %vm46, %v39, 0
    %v60 = vsel %vm46, %v40, 0
    %v63 = vsel %vm46, %v41, 0
    %v66 = vsel %vm46, %v42, 0
    %v69 = vsel %vm46, %v43, 0
    %71 = vmatprep.subr.mxu0 %v45
    %72 = vmatpush1.msra.mxu0 %v44
    %73 = vmatprep.subr.mxu0 0.0
    %74 = vmatpush1.msra.mxu0 0.0
    %75 = vmatprep.subr.mxu0 0.0
    %76 = vmatpush1.msra.mxu0 0.0
    %77 = vmatprep.subr.mxu0 0.0
    %78 = vmatpush1.msra.mxu0 0.0
    %79 = vmatprep.subr.mxu0 0.0
    %80 = vmatpush1.msra.mxu0 0.0
    %81 = vmatprep.subr.mxu0 0.0
    %82 = vmatpush1.msra.mxu0 0.0
    %83 = vmatprep.subr.mxu0 0.0
    %84 = vmatpush1.msra.mxu0 0.0
    %85 = vmatprep.subr.mxu0 0.0
    %86 = vmatpush1.msra.mxu0 0.0
    %87 = vmatprep.subr.mxu0 0.0
    %88 = vmatpush1.msra.mxu0 0.0
    %89 = vmatprep.subr.mxu0 0.0
    %90 = vmatpush1.msra.mxu0 0.0
    %91 = vmatprep.subr.mxu0 0.0
    %92 = vmatpush1.msra.mxu0 0.0
    %93 = vmatprep.subr.mxu0 0.0
    %94 = vmatpush1.msra.mxu0 0.0
    %95 = vmatprep.subr.mxu0 0.0
    %96 = vmatpush1.msra.mxu0 0.0
    %97 = vmatprep.subr.mxu0 0.0
    %98 = vmatpush1.msra.mxu0 0.0
    %99 = vmatprep.subr.mxu0 0.0
    %100 = vmatpush1.msra.mxu0 0.0
    %101 = vmatprep.subr.mxu0 0.0
    %102 = vmatpush1.msra.mxu0 0.0
    %103 = vmatprep.subr.mxu0 0.0
    %104 = vmatpush1.msra.mxu0 0.0
    %105 = vmatprep.subr.mxu0 0.0
    %106 = vmatpush1.msra.mxu0 0.0
    %107 = vmatprep.subr.mxu0 0.0
    %108 = vmatpush1.msra.mxu0 0.0
    %109 = vmatprep.subr.mxu0 0.0
    %110 = vmatpush1.msra.mxu0 0.0
    %111 = vmatprep.subr.mxu0 0.0
    %112 = vmatpush1.msra.mxu0 0.0
    %113 = vmatprep.subr.mxu0 0.0
    %114 = vmatpush1.msra.mxu0 0.0
    %115 = vmatprep.subr.mxu0 0.0
    %116 = vmatpush1.msra.mxu0 0.0
    %117 = vmatprep.subr.mxu0 0.0
    %118 = vmatpush1.msra.mxu0 0.0
    %119 = vmatprep.subr.mxu0 0.0
    %120 = vmatpush1.msra.mxu0 0.0
    %121 = vmatprep.subr.mxu0 0.0
    %122 = vmatpush1.msra.mxu0 0.0
    %123 = vmatprep.subr.mxu0 0.0
    %124 = vmatpush1.msra.mxu0 0.0
    %125 = vmatprep.subr.mxu0 0.0
    %126 = vmatpush1.msra.mxu0 0.0
    %127 = vmatprep.subr.mxu0 0.0
    %128 = vmatpush1.msra.mxu0 0.0
    %129 = vmatprep.subr.mxu0 0.0
    %130 = vmatpush1.msra.mxu0 0.0
    %131 = vmatprep.subr.mxu0 0.0
    %132 = vmatpush1.msra.mxu0 0.0
    %133 = vmatprep.subr.mxu0 0.0
    %134 = vmatpush1.msra.mxu0 0.0
    %135 = vmatprep.mubr.f32.mxu0 0.0
    %136 = vmatmul.mubr.f32.gmra.mrb[0].mxu0 %v48
    %v137 = vpop.f32.mrb[0].mxu0
    %v138 = vadd.f32 0.0, %v137
    %v139 = vpop.f32.mrb[0].mxu0
    %v140 = vadd.f32 0.0, %v139
    %141 = vmatprep.mubr.f32.mxu0 0.0
    %142 = vmatmul.mubr.f32.gmra.mrb[0].mxu0 %v51
    %v143 = vpop.f32.mrb[0].mxu0
    %v144 = vadd.f32 0.0, %v143
    %v145 = vpop.f32.mrb[0].mxu0
    %v146 = vadd.f32 0.0, %v145
    %147 = vmatprep.mubr.f32.mxu0 0.0
    %148 = vmatmul.mubr.f32.gmra.mrb[0].mxu0 %v54
    %v149 = vpop.f32.mrb[0].mxu0
    %v150 = vadd.f32 0.0, %v149
    %v151 = vpop.f32.mrb[0].mxu0
    %152 = vmatprep.mubr.f32.mxu0 0.0
    %153 = vmatmul.mubr.f32.gmra.mrb[0].mxu0 %v57
    %v154 = vpop.f32.mrb[0].mxu0
    %v155 = vadd.f32 0.0, %v154
    %v156 = vpop.f32.mrb[0].mxu0
    %157 = vmatprep.mubr.f32.mxu0 0.0
    %158 = vmatmul.mubr.f32.gmra.mrb[0].mxu0 %v60
    %v159 = vpop.f32.mrb[0].mxu0
    %v160 = vadd.f32 0.0, %v159
    %v161 = vpop.f32.mrb[0].mxu0
    %162 = vmatprep.mubr.f32.mxu0 0.0
    %163 = vmatmul.mubr.f32.gmra.mrb[0].mxu0 %v63
    %v164 = vpop.f32.mrb[0].mxu0
    %v165 = vadd.f32 0.0, %v164
    %v166 = vpop.f32.mrb[0].mxu0
    %167 = vmatprep.mubr.f32.mxu0 0.0
    %168 = vmatmul.mubr.f32.gmra.mrb[0].mxu0 %v66
    %v169 = vpop.f32.mrb[0].mxu0
    %v170 = vadd.f32 0.0, %v169
    %v171 = vpop.f32.mrb[0].mxu0
    %172 = vmatprep.mubr.f32.mxu0 0.0
    %173 = vmatmul.mubr.f32.gmra.mrb[0].mxu0 %v69
    %v174 = vpop.f32.mrb[0].mxu0
    %v175 = vadd.f32 0.0, %v174
    %v176 = vpop.f32.mrb[0].mxu0
    %177 = vdwg.mxu0
    %v178 = vpack.c.bf16 %v155, %v150
    %v179 = vld [vmem:[#allocation2] sm:$0xff]
    %v180 = vld [vmem:[#allocation2 + $0x8] sm:$0xff]
    %v181 = vld [vmem:[#allocation2 + $0x10] sm:$0xff]
    %v182 = vld [vmem:[#allocation2 + $0x18] sm:$0xff]
    %v183 = vld [vmem:[#allocation2 + $0x20] sm:$0xff]
    %v184 = vld [vmem:[#allocation2 + $0x28] sm:$0x11]
    %v191 = vunpack.c.l.b16 %v179
    %v192 = vunpack.c.h.b16 %v179
    %v193 = vunpack.c.l.b16 %v180
    %v194 = vunpack.c.h.b16 %v180
    %v195 = vunpack.c.l.b16 %v181
    %v196 = vunpack.c.h.b16 %v181
    %v197 = vunpack.c.l.b16 %v182
    %v198 = vunpack.c.h.b16 %v182
    %v199 = vunpack.c.l.b16 %v183
    %v200 = vunpack.c.h.b16 %v183
    %v201 = vunpack.c.l.b16 %v184
    %v202 = vunpack.c.h.b16 %v184
    %v203 = vpack.c.b16 %v193, %v191
    %v204 = vpack.c.b16 %v194, %v192
    %v205 = vpack.c.b16 %v197, %v195
    %v206 = vpack.c.b16 %v198, %v196
    %v207 = vpack.c.b16 %v201, %v199
    %v208 = vpack.c.b16 %v202, %v200
    %vm213 = vcmask 343040
    %v215 = vsel %vm213, %v178, 0
    %vm217 = vcmask 1044480
    %v219 = vsel %vm217, %v207, 0
    %v222 = vsel %vm217, %v208, 0
    %224 = vmatprep.subr.bf16.mxu0 %v204
    %225 = vmatpush1.bf16.msra.mxu0 %v203
    %226 = vmatprep.subr.bf16.mxu0 %v206
    %227 = vmatpush1.bf16.msra.mxu0 %v205
    %228 = vmatprep.subr.bf16.mxu0 %v222
    %229 = vmatpush1.bf16.msra.mxu0 %v219
    %230 = vmatprep.subr.bf16.mxu0 0
    %231 = vmatpush1.bf16.msra.mxu0 0
    %232 = vmatprep.subr.bf16.mxu0 0
    %233 = vmatpush1.bf16.msra.mxu0 0
    %234 = vmatprep.subr.bf16.mxu0 0
    %235 = vmatpush1.bf16.msra.mxu0 0
    %236 = vmatprep.subr.bf16.mxu0 0
    %237 = vmatpush1.bf16.msra.mxu0 0
    %238 = vmatprep.subr.bf16.mxu0 0
    %239 = vmatpush1.bf16.msra.mxu0 0
    %240 = vmatprep.subr.bf16.mxu0 0
    %241 = vmatpush1.bf16.msra.mxu0 0
    %242 = vmatprep.subr.bf16.mxu0 0
    %243 = vmatpush1.bf16.msra.mxu0 0
    %244 = vmatprep.subr.bf16.mxu0 0
    %245 = vmatpush1.bf16.msra.mxu0 0
    %246 = vmatprep.subr.bf16.mxu0 0
    %247 = vmatpush1.bf16.msra.mxu0 0
    %248 = vmatprep.subr.bf16.mxu0 0
    %249 = vmatpush1.bf16.msra.mxu0 0
    %250 = vmatprep.subr.bf16.mxu0 0
    %251 = vmatpush1.bf16.msra.mxu0 0
    %252 = vmatprep.subr.bf16.mxu0 0
    %253 = vmatpush1.bf16.msra.mxu0 0
    %254 = vmatprep.subr.bf16.mxu0 0
    %255 = vmatpush1.bf16.msra.mxu0 0
    %256 = vmatprep.mubr.bf16.mxu0 0
    %257 = vmatmul.mubr.bf16.gmra.mrb[0].mxu0 %v215
    %v258 = vpop.f32.mrb[0].mxu0
    %v259 = vadd.f32 0.0, %v258
    %v260 = vpop.f32.mrb[0].mxu0
    %v261 = vadd.f32 0.0, %v260
    %v262 = vpop.f32.mrb[0].mxu0
    %v263 = vadd.f32 0.0, %v262
    %v264 = vpop.f32.mrb[0].mxu0
    %v265 = vadd.f32 0.0, %v264
    %266 = vdwg.mxu0
    %v267 = vadd.f32 %v138, %v259
    %v268 = vadd.f32 %v140, %v261
    %v269 = vadd.f32 %v144, %v263
    %v270 = vadd.f32 %v146, %v265
    %v271 = vpack.c.bf16 %v165, %v160
    %s272 = scalar_lea.vmem [#allocation2], 48
    %v273 = vld [vmem:[%s272] sm:$0xff]
    %v274 = vld [vmem:[%s272 + $0x8] sm:$0xff]
    %v275 = vld [vmem:[%s272 + $0x10] sm:$0xff]
    %v276 = vld [vmem:[%s272 + $0x18] sm:$0xff]
    %v277 = vld [vmem:[%s272 + $0x20] sm:$0xff]
    %v278 = vld [vmem:[%s272 + $0x28] sm:$0x11]
    %v285 = vunpack.c.l.b16 %v273
    %v286 = vunpack.c.h.b16 %v273
    %v287 = vunpack.c.l.b16 %v274
    %v288 = vunpack.c.h.b16 %v274
    %v289 = vunpack.c.l.b16 %v275
    %v290 = vunpack.c.h.b16 %v275
    %v291 = vunpack.c.l.b16 %v276
    %v292 = vunpack.c.h.b16 %v276
    %v293 = vunpack.c.l.b16 %v277
    %v294 = vunpack.c.h.b16 %v277
    %v295 = vunpack.c.l.b16 %v278
    %v296 = vunpack.c.h.b16 %v278
    %v297 = vpack.c.b16 %v287, %v285
    %v298 = vpack.c.b16 %v288, %v286
    %v299 = vpack.c.b16 %v291, %v289
    %v300 = vpack.c.b16 %v292, %v290
    %v301 = vpack.c.b16 %v295, %v293
    %v302 = vpack.c.b16 %v296, %v294
    %v308 = vsel %vm213, %v271, 0
    %v311 = vsel %vm217, %v301, 0
    %v314 = vsel %vm217, %v302, 0
    %316 = vmatprep.subr.bf16.mxu0 %v298
    %317 = vmatpush1.bf16.msra.mxu0 %v297
    %318 = vmatprep.subr.bf16.mxu0 %v300
    %319 = vmatpush1.bf16.msra.mxu0 %v299
    %320 = vmatprep.subr.bf16.mxu0 %v314
    %321 = vmatpush1.bf16.msra.mxu0 %v311
    %322 = vmatprep.subr.bf16.mxu0 0
    %323 = vmatpush1.bf16.msra.mxu0 0
    %324 = vmatprep.subr.bf16.mxu0 0
    %325 = vmatpush1.bf16.msra.mxu0 0
    %326 = vmatprep.subr.bf16.mxu0 0
    %327 = vmatpush1.bf16.msra.mxu0 0
    %328 = vmatprep.subr.bf16.mxu0 0
    %329 = vmatpush1.bf16.msra.mxu0 0
    %330 = vmatprep.subr.bf16.mxu0 0
    %331 = vmatpush1.bf16.msra.mxu0 0
    %332 = vmatprep.subr.bf16.mxu0 0
    %333 = vmatpush1.bf16.msra.mxu0 0
    %334 = vmatprep.subr.bf16.mxu0 0
    %335 = vmatpush1.bf16.msra.mxu0 0
    %336 = vmatprep.subr.bf16.mxu0 0
    %337 = vmatpush1.bf16.msra.mxu0 0
    %338 = vmatprep.subr.bf16.mxu0 0
    %339 = vmatpush1.bf16.msra.mxu0 0
    %340 = vmatprep.subr.bf16.mxu0 0
    %341 = vmatpush1.bf16.msra.mxu0 0
    %342 = vmatprep.subr.bf16.mxu0 0
    %343 = vmatpush1.bf16.msra.mxu0 0
    %344 = vmatprep.subr.bf16.mxu0 0
    %345 = vmatpush1.bf16.msra.mxu0 0
    %346 = vmatprep.subr.bf16.mxu0 0
    %347 = vmatpush1.bf16.msra.mxu0 0
    %348 = vmatprep.mubr.bf16.mxu0 0
    %349 = vmatmul.mubr.bf16.gmra.mrb[0].mxu0 %v308
    %v350 = vpop.f32.mrb[0].mxu0
    %v351 = vadd.f32 0.0, %v350
    %v352 = vpop.f32.mrb[0].mxu0
    %v353 = vadd.f32 0.0, %v352
    %v354 = vpop.f32.mrb[0].mxu0
    %v355 = vadd.f32 0.0, %v354
    %v356 = vpop.f32.mrb[0].mxu0
    %v357 = vadd.f32 0.0, %v356
    %358 = vdwg.mxu0
    %v359 = vadd.f32 %v267, %v351
    %v360 = vadd.f32 %v268, %v353
    %v361 = vadd.f32 %v269, %v355
    %v362 = vadd.f32 %v270, %v357
    %v363 = vpack.c.bf16 %v175, %v170
    %s364 = scalar_lea.vmem [#allocation2], 96
    %v365 = vld [vmem:[%s364] sm:$0xff]
    %v366 = vld [vmem:[%s364 + $0x8] sm:$0xff]
    %v367 = vld [vmem:[%s364 + $0x10] sm:$0xff]
    %v368 = vld [vmem:[%s364 + $0x18] sm:$0xff]
    %v369 = vld [vmem:[%s364 + $0x20] sm:$0xff]
    %v370 = vld [vmem:[%s364 + $0x28] sm:$0x11]
    %v377 = vunpack.c.l.b16 %v365
    %v378 = vunpack.c.h.b16 %v365
    %v379 = vunpack.c.l.b16 %v366
    %v380 = vunpack.c.h.b16 %v366
    %v381 = vunpack.c.l.b16 %v367
    %v382 = vunpack.c.h.b16 %v367
    %v383 = vunpack.c.l.b16 %v368
    %v384 = vunpack.c.h.b16 %v368
    %v385 = vunpack.c.l.b16 %v369
    %v386 = vunpack.c.h.b16 %v369
    %v387 = vunpack.c.l.b16 %v370
    %v388 = vunpack.c.h.b16 %v370
    %v389 = vpack.c.b16 %v379, %v377
    %v390 = vpack.c.b16 %v380, %v378
    %v391 = vpack.c.b16 %v383, %v381
    %v392 = vpack.c.b16 %v384, %v382
    %v393 = vpack.c.b16 %v387, %v385
    %v394 = vpack.c.b16 %v388, %v386
    %v400 = vsel %vm213, %v363, 0
    %v403 = vsel %vm217, %v393, 0
    %v406 = vsel %vm217, %v394, 0
    %408 = vmatprep.subr.bf16.mxu0 %v390
    %409 = vmatpush1.bf16.msra.mxu0 %v389
    %410 = vmatprep.subr.bf16.mxu0 %v392
    %411 = vmatpush1.bf16.msra.mxu0 %v391
    %412 = vmatprep.subr.bf16.mxu0 %v406
    %413 = vmatpush1.bf16.msra.mxu0 %v403
    %414 = vmatprep.subr.bf16.mxu0 0
    %415 = vmatpush1.bf16.msra.mxu0 0
    %416 = vmatprep.subr.bf16.mxu0 0
    %417 = vmatpush1.bf16.msra.mxu0 0
    %418 = vmatprep.subr.bf16.mxu0 0
    %419 = vmatpush1.bf16.msra.mxu0 0
    %420 = vmatprep.subr.bf16.mxu0 0
    %421 = vmatpush1.bf16.msra.mxu0 0
    %422 = vmatprep.subr.bf16.mxu0 0
    %423 = vmatpush1.bf16.msra.mxu0 0
    %424 = vmatprep.subr.bf16.mxu0 0
    %425 = vmatpush1.bf16.msra.mxu0 0
    %426 = vmatprep.subr.bf16.mxu0 0
    %427 = vmatpush1.bf16.msra.mxu0 0
    %428 = vmatprep.subr.bf16.mxu0 0
    %429 = vmatpush1.bf16.msra.mxu0 0
    %430 = vmatprep.subr.bf16.mxu0 0
    %431 = vmatpush1.bf16.msra.mxu0 0
    %432 = vmatprep.subr.bf16.mxu0 0
    %433 = vmatpush1.bf16.msra.mxu0 0
    %434 = vmatprep.subr.bf16.mxu0 0
    %435 = vmatpush1.bf16.msra.mxu0 0
    %436 = vmatprep.subr.bf16.mxu0 0
    %437 = vmatpush1.bf16.msra.mxu0 0
    %438 = vmatprep.subr.bf16.mxu0 0
    %439 = vmatpush1.bf16.msra.mxu0 0
    %440 = vmatprep.mubr.bf16.mxu0 0
    %441 = vmatmul.mubr.bf16.gmra.mrb[0].mxu0 %v400
    %v442 = vpop.f32.mrb[0].mxu0
    %v443 = vadd.f32 0.0, %v442
    %v444 = vpop.f32.mrb[0].mxu0
    %v445 = vadd.f32 0.0, %v444
    %v446 = vpop.f32.mrb[0].mxu0
    %v447 = vadd.f32 0.0, %v446
    %v448 = vpop.f32.mrb[0].mxu0
    %v449 = vadd.f32 0.0, %v448
    %450 = vdwg.mxu0
    %v451 = vadd.f32 %v359, %v443
    %v452 = vadd.f32 %v360, %v445
    %v453 = vadd.f32 %v361, %v447
    %v454 = vadd.f32 %v362, %v449
    %v455 = vadd.f32 %v451, %v452
    %456 = vadd.xlane.f32.xlu0 %v455
    %v457 = vpop.xlane.xlu0 %456
    %v458 = vadd.f32 %v453, %v454
    %459 = vadd.xlane.f32.xlu0 %v458
    %v460 = vpop.xlane.xlu0 %459
    %v461 = vadd.f32 %v457, %v460
    %v462 = vrcp.pop 324.0
    %v463 = vmul.f32 %v461, %v462
    %v464 = vlaneseq
    %v465 = vand.u32 %v464, 127
    %v466 = vadd.s32 %v465, 128
    %vm467 = vcmp.lt.s32.totalorder %v465, 162
    %vm468 = vcmp.lt.s32.totalorder %v466, 162
    %v469 = vsel %vm467, 1, 0
    %v470 = vsel %vm468, 1, 0
    %v471 = vcvt.s32.f32 %v469
    %v472 = vcvt.s32.f32 %v470
    %v473 = vsub.f32 %v451, %v463
    %v474 = vsub.f32 %v452, %v463
    %v475 = vsub.f32 %v453, %v463
    %v476 = vsub.f32 %v454, %v463
    %v477 = vmul.f32 %v473, %v471
    %v478 = vmul.f32 %v474, %v472
    %v479 = vmul.f32 %v475, %v471
    %v480 = vmul.f32 %v476, %v472
    %v481 = vmul.f32 %v477, %v477
    %v482 = vmul.f32 %v478, %v478
    %v483 = vmul.f32 %v479, %v479
    %v484 = vmul.f32 %v480, %v480
    %v485 = vadd.f32 %v481, %v482
    %486 = vadd.xlane.f32.xlu0 %v485
    %v487 = vpop.xlane.xlu0 %486
    %v488 = vadd.f32 %v483, %v484
    %489 = vadd.xlane.f32.xlu0 %v488
    %v490 = vpop.xlane.xlu0 %489
    %v491 = vadd.f32 %v487, %v490
    %v492 = vmul.f32 %v491, %v462
    %v493 = vld [vmem:[%s3] sm:$0xff]
    %v494 = vadd.f32 %v492, 1e-05
    %v495 = vrsqrt.pop %v494
    %v496 = vmul.f32 %v493, %v495
    %v497 = vld [vmem:[%s4] sm:$0xff]
    %v498 = vmul.f32 %v463, %v496
    %v499 = vsub.f32 %v497, %v498
    %501 = vset.pattern.permute.xlu0 0
    %502 = vperm.xlu0 %501, %v496
    %v503 = vpop.permute.xlu0 %502
    %v505 = vmul.f32 %v451, %v503
    %v506 = vmul.f32 %v452, %v503
    %v507 = vmul.f32 %v453, %v503
    %v508 = vmul.f32 %v454, %v503
    %510 = vset.pattern.permute.xlu0 0
    %511 = vperm.xlu0 %510, %v499
    %v512 = vpop.permute.xlu0 %511
    %v514 = vadd.f32 %v505, %v512
    %v515 = vadd.f32 %v506, %v512
    %v516 = vadd.f32 %v507, %v512
    %v517 = vadd.f32 %v508, %v512
    %v518 = vmax.f32 %v514, 0.0
    %v519 = vmax.f32 %v515, 0.0
    %v520 = vmax.f32 %v516, 0.0
    %v521 = vmax.f32 %v517, 0.0
    %v522 = vmul.f32 %v518, %v471
    %v523 = vmul.f32 %v519, %v472
    %v524 = vmul.f32 %v520, %v471
    %v525 = vmul.f32 %v521, %v472
    %526 = vst [vmem:[#allocation5] sm:$0xff] %v522
    %527 = vst [vmem:[#allocation5 + $0x8] sm:$0xff] %v523
    %528 = vst [vmem:[#allocation5 + $0x10] sm:$0xff] %v524
    %529 = vst [vmem:[#allocation5 + $0x18] sm:$0xff] %v525
    // Predicated region
    $region26: #{tpu_custom_call.1} parent=1 // pred_check
      _
    $region27: #{tpu_custom_call.1} parent=1 // pred_check_branch
      %531 = sbr.rel (0) target = $region29
    $region28: #{tpu_custom_call.1} parent=1 // pred_region
      %s533 = ssub.s32 512, 512
      %534 = vsyncadd [#allocation4], %s533
      %s535 = sshll.u32 [#allocation5], 4
      %s536 = int_to_ptr.vmem [resolvable:$true] %s535
      %541 = dma.vmem_to_hbm [thread:$0]  %s536, 512, %s5, [#allocation4], 256, 256, 16
    $region29: #{tpu_custom_call.1} parent=1 // pred_fallthru
      _
    // Predicated region
    $region30: #{tpu_custom_call.1} parent=1 // pred_check
      _
    $region31: #{tpu_custom_call.1} parent=1 // pred_check_branch
      %543 = sbr.rel (0) target = $region33
    $region32: #{tpu_custom_call.1} parent=1 // pred_region
      %544 = dma.done [#allocation4], 512
    $region33: #{tpu_custom_call.1} parent=1 // pred_fallthru
      _
    %545 = vsyncpa [#allocation3], 1
    %546 = vsyncpa [#allocation4], 1

</llo_original>
